<compile_context>
chip_gen: v7x
topology: tpu7x:2x2x1
jax: 0.10.0
libtpu: 0.0.40
codegen_flags: <defaults>
</compile_context>

<pallas_src>
import jax
import jax.numpy as jnp
from jax.experimental import pallas as pl
from jax.experimental.pallas import tpu as pltpu


def _round_up(n, m):
    return ((n + m - 1) // m) * m


def _mlp_kernel(x_ref, w1_ref, b1_ref, w2_ref, b2_ref, w3_ref, b3_ref, o_ref):
    """Fused 3-layer MLP on a [2, TILE_B] batch tile (batch on lanes).

    All matmuls are unrolled into VPU broadcast-FMAs:
        h[j, :] = sum_k W[j, k] * x[k, :] + b[j]
    """
    x = x_ref[...]          # [2, T]  float32
    w1 = w1_ref[...]        # [8, 2]  (PyTorch [out, in] layout)
    w2 = w2_ref[...]        # [8, 8]
    w3 = w3_ref[...]        # [1, 8]

    # Layer 1: Linear(2, 8) + ReLU  -> [8, T]
    h1 = b1_ref[...] + w1[:, 0:1] * x[0:1, :] + w1[:, 1:2] * x[1:2, :]
    h1 = jnp.maximum(h1, 0.0)

    # Layer 2: Linear(8, 8) + ReLU  -> [8, T]
    h2 = b2_ref[...] + w2[:, 0:1] * h1[0:1, :]
    for k in range(1, 8):
        h2 = h2 + w2[:, k:k + 1] * h1[k:k + 1, :]
    h2 = jnp.maximum(h2, 0.0)

    # Layer 3: Linear(8, 1) + Tanh  -> [1, T]  (lane-dense output store)
    h3 = b3_ref[...] + w3[:, 0:1] * h2[0:1, :]
    for k in range(1, 8):
        h3 = h3 + w3[:, k:k + 1] * h2[k:k + 1, :]
    o_ref[...] = jnp.tanh(h3).astype(o_ref.dtype)


def neural_network_forward(x, params, *, max_tile_b=512):
    """x: [B, 2] float32 -> [B, 1] float32."""
    w1, b1, w2, b2, w3, b3 = params
    B = x.shape[0]

    # Batch tile on the lane axis: multiple of 128, capped so intermediates
    # ([8, TILE_B] f32) stay comfortably within the vreg / scoped-VMEM budget
    # on all generations (v5e/v6e 128 MiB, v7x 64 MiB).
    tile_b = min(max_tile_b, _round_up(B, 128))
    b_pad = _round_up(B, tile_b)

    x_t = x.T  # [2, B] -- features on sublanes, batch on lanes
    if b_pad != B:
        x_t = jnp.pad(x_t, ((0, 0), (0, b_pad - B)))

    grid = (b_pad // tile_b,)
    out_t = pl.pallas_call(
        _mlp_kernel,
        out_shape=jax.ShapeDtypeStruct((1, b_pad), jnp.float32),
        grid=grid,
        in_specs=[
            # x tile: a new batch slab per grid step (auto double-buffered).
            pl.BlockSpec((2, tile_b), lambda i: (0, i)),
            # Weights / biases: constant block index -> DMA'd once, resident.
            pl.BlockSpec((8, 2), lambda i: (0, 0)),
            pl.BlockSpec((8, 1), lambda i: (0, 0)),
            pl.BlockSpec((8, 8), lambda i: (0, 0)),
            pl.BlockSpec((8, 1), lambda i: (0, 0)),
            pl.BlockSpec((1, 8), lambda i: (0, 0)),
            pl.BlockSpec((1, 1), lambda i: (0, 0)),
        ],
        out_specs=pl.BlockSpec((1, tile_b), lambda i: (0, i)),
        compiler_params=pltpu.CompilerParams(
            dimension_semantics=("parallel",)),  # megacore sharding on v7x
    )(x_t, w1, b1, w2, b2, w3, b3)

    return out_t[:, :B].T  # [B, 1]


def init_params(key):
    """PyTorch-style default init: uniform(+/- 1/sqrt(fan_in)).

    Weights are stored in PyTorch's native [out_features, in_features] layout;
    biases as [out_features, 1] columns (broadcast over the lane/batch axis).
    """
    ks = jax.random.split(key, 6)

    def lin(kw, kb, fan_in, fan_out):
        bound = 1.0 / jnp.sqrt(jnp.float32(fan_in))
        w = jax.random.uniform(kw, (fan_out, fan_in), jnp.float32, -bound, bound)
        b = jax.random.uniform(kb, (fan_out, 1), jnp.float32, -bound, bound)
        return w, b

    w1, b1 = lin(ks[0], ks[1], 2, 8)
    w2, b2 = lin(ks[2], ks[3], 8, 8)
    w3, b3 = lin(ks[4], ks[5], 8, 1)
    return (w1, b1, w2, b2, w3, b3)


def reference_forward(x, params):
    """Plain-JAX reference (same math as the PyTorch module)."""
    w1, b1, w2, b2, w3, b3 = params
    h = jnp.maximum(x @ w1.T + b1[:, 0], 0.0)
    h = jnp.maximum(h @ w2.T + b2[:, 0], 0.0)
    return jnp.tanh(h @ w3.T + b3[:, 0])


if __name__ == "__main__":
    key = jax.random.PRNGKey(0)
    k_params, k_x1, k_x2 = jax.random.split(key, 3)

    params = init_params(k_params)

    # Small demo batch (module spec: in_features=2, out_features=1).
    x = jax.random.normal(k_x1, (8, 2), jnp.float32)
    out = jax.block_until_ready(neural_network_forward(x, params))
    ref = reference_forward(x, params)
    assert out.shape == (8, 1), out.shape
    assert jnp.allclose(out, ref, atol=1e-5, rtol=1e-5), "mismatch vs reference (B=8)"

    # Non-multiple-of-tile batch exercises the padding + multi-step grid path.
    x2 = jax.random.normal(k_x2, (200, 2), jnp.float32)
    out2 = jax.block_until_ready(neural_network_forward(x2, params, max_tile_b=128))
    ref2 = reference_forward(x2, params)
    assert out2.shape == (200, 1), out2.shape
    assert jnp.allclose(out2, ref2, atol=1e-5, rtol=1e-5), "mismatch vs reference (B=200)"

    print("KERNEL_OK")
</pallas_src>

<mosaic_0001>
module attributes {stable_mosaic.version = 11 : i64} {
  func.func @_mlp_kernel(%arg0: i32, %arg1: memref<2x128xf32, #tpu.memory_space<vmem>>, %arg2: memref<8x2xf32, #tpu.memory_space<vmem>>, %arg3: memref<8x1xf32, #tpu.memory_space<vmem>>, %arg4: memref<8x8xf32, #tpu.memory_space<vmem>>, %arg5: memref<8x1xf32, #tpu.memory_space<vmem>>, %arg6: memref<1x8xf32, #tpu.memory_space<vmem>>, %arg7: memref<1x1xf32, #tpu.memory_space<vmem>>, %arg8: memref<1x128xf32, #tpu.memory_space<vmem>>) attributes {dimension_semantics = [#tpu.dimension_semantics<parallel>], iteration_bounds = array<i64: 1>, scalar_prefetch = 0 : i64, scratch_operands = 0 : i64, tpu.core_type = #tpu.core_type<tc>, window_params = [{transform_indices = @transform_0, window_bounds = array<i64: 2, 128>}, {pipeline_mode = #tpu.pipeline_mode<synchronous>, transform_indices = @transform_1, window_bounds = array<i64: 8, 2>}, {pipeline_mode = #tpu.pipeline_mode<synchronous>, transform_indices = @transform_2, window_bounds = array<i64: 8, 1>}, {pipeline_mode = #tpu.pipeline_mode<synchronous>, transform_indices = @transform_3, window_bounds = array<i64: 8, 8>}, {pipeline_mode = #tpu.pipeline_mode<synchronous>, transform_indices = @transform_4, window_bounds = array<i64: 8, 1>}, {pipeline_mode = #tpu.pipeline_mode<synchronous>, transform_indices = @transform_5, window_bounds = array<i64: 1, 8>}, {pipeline_mode = #tpu.pipeline_mode<synchronous>, transform_indices = @transform_6, window_bounds = array<i64: 1, 1>}, {transform_indices = @transform_7, window_bounds = array<i64: 1, 128>}]} {
    %c0 = arith.constant 0 : index
    %c0_0 = arith.constant 0 : index
    %0 = vector.load %arg1[%c0, %c0_0] : memref<2x128xf32, #tpu.memory_space<vmem>>, vector<2x128xf32>
    %c0_1 = arith.constant 0 : index
    %c0_2 = arith.constant 0 : index
    %1 = vector.load %arg2[%c0_1, %c0_2] : memref<8x2xf32, #tpu.memory_space<vmem>>, vector<8x2xf32>
    %c0_3 = arith.constant 0 : index
    %c0_4 = arith.constant 0 : index
    %2 = vector.load %arg4[%c0_3, %c0_4] : memref<8x8xf32, #tpu.memory_space<vmem>>, vector<8x8xf32>
    %c0_5 = arith.constant 0 : index
    %c0_6 = arith.constant 0 : index
    %3 = vector.load %arg6[%c0_5, %c0_6] : memref<1x8xf32, #tpu.memory_space<vmem>>, vector<1x8xf32>
    %c0_7 = arith.constant 0 : index
    %c0_8 = arith.constant 0 : index
    %4 = vector.load %arg3[%c0_7, %c0_8] : memref<8x1xf32, #tpu.memory_space<vmem>>, vector<8x1xf32>
    %5 = vector.extract_strided_slice %1 {offsets = [0, 0], sizes = [8, 1], strides = [1, 1]} : vector<8x2xf32> to vector<8x1xf32>
    %6 = vector.extract_strided_slice %0 {offsets = [0, 0], sizes = [1, 128], strides = [1, 1]} : vector<2x128xf32> to vector<1x128xf32>
    %7 = vector.broadcast %5 : vector<8x1xf32> to vector<8x128xf32>
    %8 = vector.broadcast %6 : vector<1x128xf32> to vector<8x128xf32>
    %9 = arith.mulf %7, %8 : vector<8x128xf32>
    %10 = vector.broadcast %4 : vector<8x1xf32> to vector<8x128xf32>
    %11 = arith.addf %10, %9 : vector<8x128xf32>
    %12 = vector.extract_strided_slice %1 {offsets = [0, 1], sizes = [8, 1], strides = [1, 1]} : vector<8x2xf32> to vector<8x1xf32>
    %13 = vector.extract_strided_slice %0 {offsets = [1, 0], sizes = [1, 128], strides = [1, 1]} : vector<2x128xf32> to vector<1x128xf32>
    %14 = vector.broadcast %12 : vector<8x1xf32> to vector<8x128xf32>
    %15 = vector.broadcast %13 : vector<1x128xf32> to vector<8x128xf32>
    %16 = arith.mulf %14, %15 : vector<8x128xf32>
    %17 = arith.addf %11, %16 : vector<8x128xf32>
    %cst = arith.constant 0.000000e+00 : f32
    %18 = vector.broadcast %cst : f32 to vector<8x128xf32>
    %19 = arith.maximumf %17, %18 : vector<8x128xf32>
    %c0_9 = arith.constant 0 : index
    %c0_10 = arith.constant 0 : index
    %20 = vector.load %arg5[%c0_9, %c0_10] : memref<8x1xf32, #tpu.memory_space<vmem>>, vector<8x1xf32>
    %21 = vector.extract_strided_slice %2 {offsets = [0, 0], sizes = [8, 1], strides = [1, 1]} : vector<8x8xf32> to vector<8x1xf32>
    %22 = vector.extract_strided_slice %19 {offsets = [0, 0], sizes = [1, 128], strides = [1, 1]} : vector<8x128xf32> to vector<1x128xf32>
    %23 = vector.broadcast %21 : vector<8x1xf32> to vector<8x128xf32>
    %24 = vector.broadcast %22 : vector<1x128xf32> to vector<8x128xf32>
    %25 = arith.mulf %23, %24 : vector<8x128xf32>
    %26 = vector.broadcast %20 : vector<8x1xf32> to vector<8x128xf32>
    %27 = arith.addf %26, %25 : vector<8x128xf32>
    %28 = vector.extract_strided_slice %2 {offsets = [0, 1], sizes = [8, 1], strides = [1, 1]} : vector<8x8xf32> to vector<8x1xf32>
    %29 = vector.extract_strided_slice %19 {offsets = [1, 0], sizes = [1, 128], strides = [1, 1]} : vector<8x128xf32> to vector<1x128xf32>
    %30 = vector.broadcast %28 : vector<8x1xf32> to vector<8x128xf32>
    %31 = vector.broadcast %29 : vector<1x128xf32> to vector<8x128xf32>
    %32 = arith.mulf %30, %31 : vector<8x128xf32>
    %33 = arith.addf %27, %32 : vector<8x128xf32>
    %34 = vector.extract_strided_slice %2 {offsets = [0, 2], sizes = [8, 1], strides = [1, 1]} : vector<8x8xf32> to vector<8x1xf32>
    %35 = vector.extract_strided_slice %19 {offsets = [2, 0], sizes = [1, 128], strides = [1, 1]} : vector<8x128xf32> to vector<1x128xf32>
    %36 = vector.broadcast %34 : vector<8x1xf32> to vector<8x128xf32>
    %37 = vector.broadcast %35 : vector<1x128xf32> to vector<8x128xf32>
    %38 = arith.mulf %36, %37 : vector<8x128xf32>
    %39 = arith.addf %33, %38 : vector<8x128xf32>
    %40 = vector.extract_strided_slice %2 {offsets = [0, 3], sizes = [8, 1], strides = [1, 1]} : vector<8x8xf32> to vector<8x1xf32>
    %41 = vector.extract_strided_slice %19 {offsets = [3, 0], sizes = [1, 128], strides = [1, 1]} : vector<8x128xf32> to vector<1x128xf32>
    %42 = vector.broadcast %40 : vector<8x1xf32> to vector<8x128xf32>
    %43 = vector.broadcast %41 : vector<1x128xf32> to vector<8x128xf32>
    %44 = arith.mulf %42, %43 : vector<8x128xf32>
    %45 = arith.addf %39, %44 : vector<8x128xf32>
    %46 = vector.extract_strided_slice %2 {offsets = [0, 4], sizes = [8, 1], strides = [1, 1]} : vector<8x8xf32> to vector<8x1xf32>
    %47 = vector.extract_strided_slice %19 {offsets = [4, 0], sizes = [1, 128], strides = [1, 1]} : vector<8x128xf32> to vector<1x128xf32>
    %48 = vector.broadcast %46 : vector<8x1xf32> to vector<8x128xf32>
    %49 = vector.broadcast %47 : vector<1x128xf32> to vector<8x128xf32>
    %50 = arith.mulf %48, %49 : vector<8x128xf32>
    %51 = arith.addf %45, %50 : vector<8x128xf32>
    %52 = vector.extract_strided_slice %2 {offsets = [0, 5], sizes = [8, 1], strides = [1, 1]} : vector<8x8xf32> to vector<8x1xf32>
    %53 = vector.extract_strided_slice %19 {offsets = [5, 0], sizes = [1, 128], strides = [1, 1]} : vector<8x128xf32> to vector<1x128xf32>
    %54 = vector.broadcast %52 : vector<8x1xf32> to vector<8x128xf32>
    %55 = vector.broadcast %53 : vector<1x128xf32> to vector<8x128xf32>
    %56 = arith.mulf %54, %55 : vector<8x128xf32>
    %57 = arith.addf %51, %56 : vector<8x128xf32>
    %58 = vector.extract_strided_slice %2 {offsets = [0, 6], sizes = [8, 1], strides = [1, 1]} : vector<8x8xf32> to vector<8x1xf32>
    %59 = vector.extract_strided_slice %19 {offsets = [6, 0], sizes = [1, 128], strides = [1, 1]} : vector<8x128xf32> to vector<1x128xf32>
    %60 = vector.broadcast %58 : vector<8x1xf32> to vector<8x128xf32>
    %61 = vector.broadcast %59 : vector<1x128xf32> to vector<8x128xf32>
    %62 = arith.mulf %60, %61 : vector<8x128xf32>
    %63 = arith.addf %57, %62 : vector<8x128xf32>
    %64 = vector.extract_strided_slice %2 {offsets = [0, 7], sizes = [8, 1], strides = [1, 1]} : vector<8x8xf32> to vector<8x1xf32>
    %65 = vector.extract_strided_slice %19 {offsets = [7, 0], sizes = [1, 128], strides = [1, 1]} : vector<8x128xf32> to vector<1x128xf32>
    %66 = vector.broadcast %64 : vector<8x1xf32> to vector<8x128xf32>
    %67 = vector.broadcast %65 : vector<1x128xf32> to vector<8x128xf32>
    %68 = arith.mulf %66, %67 : vector<8x128xf32>
    %69 = arith.addf %63, %68 : vector<8x128xf32>
    %cst_11 = arith.constant 0.000000e+00 : f32
    %70 = vector.broadcast %cst_11 : f32 to vector<8x128xf32>
    %71 = arith.maximumf %69, %70 : vector<8x128xf32>
    %c0_12 = arith.constant 0 : index
    %c0_13 = arith.constant 0 : index
    %72 = vector.load %arg7[%c0_12, %c0_13] : memref<1x1xf32, #tpu.memory_space<vmem>>, vector<1x1xf32>
    %73 = vector.extract_strided_slice %3 {offsets = [0, 0], sizes = [1, 1], strides = [1, 1]} : vector<1x8xf32> to vector<1x1xf32>
    %74 = vector.extract_strided_slice %71 {offsets = [0, 0], sizes = [1, 128], strides = [1, 1]} : vector<8x128xf32> to vector<1x128xf32>
    %75 = vector.broadcast %73 : vector<1x1xf32> to vector<1x128xf32>
    %76 = arith.mulf %75, %74 : vector<1x128xf32>
    %77 = vector.broadcast %72 : vector<1x1xf32> to vector<1x128xf32>
    %78 = arith.addf %77, %76 : vector<1x128xf32>
    %79 = vector.extract_strided_slice %3 {offsets = [0, 1], sizes = [1, 1], strides = [1, 1]} : vector<1x8xf32> to vector<1x1xf32>
    %80 = vector.extract_strided_slice %71 {offsets = [1, 0], sizes = [1, 128], strides = [1, 1]} : vector<8x128xf32> to vector<1x128xf32>
    %81 = vector.broadcast %79 : vector<1x1xf32> to vector<1x128xf32>
    %82 = arith.mulf %81, %80 : vector<1x128xf32>
    %83 = arith.addf %78, %82 : vector<1x128xf32>
    %84 = vector.extract_strided_slice %3 {offsets = [0, 2], sizes = [1, 1], strides = [1, 1]} : vector<1x8xf32> to vector<1x1xf32>
    %85 = vector.extract_strided_slice %71 {offsets = [2, 0], sizes = [1, 128], strides = [1, 1]} : vector<8x128xf32> to vector<1x128xf32>
    %86 = vector.broadcast %84 : vector<1x1xf32> to vector<1x128xf32>
    %87 = arith.mulf %86, %85 : vector<1x128xf32>
    %88 = arith.addf %83, %87 : vector<1x128xf32>
    %89 = vector.extract_strided_slice %3 {offsets = [0, 3], sizes = [1, 1], strides = [1, 1]} : vector<1x8xf32> to vector<1x1xf32>
    %90 = vector.extract_strided_slice %71 {offsets = [3, 0], sizes = [1, 128], strides = [1, 1]} : vector<8x128xf32> to vector<1x128xf32>
    %91 = vector.broadcast %89 : vector<1x1xf32> to vector<1x128xf32>
    %92 = arith.mulf %91, %90 : vector<1x128xf32>
    %93 = arith.addf %88, %92 : vector<1x128xf32>
    %94 = vector.extract_strided_slice %3 {offsets = [0, 4], sizes = [1, 1], strides = [1, 1]} : vector<1x8xf32> to vector<1x1xf32>
    %95 = vector.extract_strided_slice %71 {offsets = [4, 0], sizes = [1, 128], strides = [1, 1]} : vector<8x128xf32> to vector<1x128xf32>
    %96 = vector.broadcast %94 : vector<1x1xf32> to vector<1x128xf32>
    %97 = arith.mulf %96, %95 : vector<1x128xf32>
    %98 = arith.addf %93, %97 : vector<1x128xf32>
    %99 = vector.extract_strided_slice %3 {offsets = [0, 5], sizes = [1, 1], strides = [1, 1]} : vector<1x8xf32> to vector<1x1xf32>
    %100 = vector.extract_strided_slice %71 {offsets = [5, 0], sizes = [1, 128], strides = [1, 1]} : vector<8x128xf32> to vector<1x128xf32>
    %101 = vector.broadcast %99 : vector<1x1xf32> to vector<1x128xf32>
    %102 = arith.mulf %101, %100 : vector<1x128xf32>
    %103 = arith.addf %98, %102 : vector<1x128xf32>
    %104 = vector.extract_strided_slice %3 {offsets = [0, 6], sizes = [1, 1], strides = [1, 1]} : vector<1x8xf32> to vector<1x1xf32>
    %105 = vector.extract_strided_slice %71 {offsets = [6, 0], sizes = [1, 128], strides = [1, 1]} : vector<8x128xf32> to vector<1x128xf32>
    %106 = vector.broadcast %104 : vector<1x1xf32> to vector<1x128xf32>
    %107 = arith.mulf %106, %105 : vector<1x128xf32>
    %108 = arith.addf %103, %107 : vector<1x128xf32>
    %109 = vector.extract_strided_slice %3 {offsets = [0, 7], sizes = [1, 1], strides = [1, 1]} : vector<1x8xf32> to vector<1x1xf32>
    %110 = vector.extract_strided_slice %71 {offsets = [7, 0], sizes = [1, 128], strides = [1, 1]} : vector<8x128xf32> to vector<1x128xf32>
    %111 = vector.broadcast %109 : vector<1x1xf32> to vector<1x128xf32>
    %112 = arith.mulf %111, %110 : vector<1x128xf32>
    %113 = arith.addf %108, %112 : vector<1x128xf32>
    %114 = math.tanh %113 : vector<1x128xf32>
    %c0_14 = arith.constant 0 : index
    %c0_15 = arith.constant 0 : index
    %115 = vector.load %arg8[%c0_14, %c0_15] : memref<1x128xf32, #tpu.memory_space<vmem>>, vector<1x128xf32>
    tpu.vector_store %arg8[%c0_14, %c0_15], %114 {strides = array<i32>} : memref<1x128xf32, #tpu.memory_space<vmem>>, vector<1x128xf32>,
    return
  }
  func.func @transform_0(%arg0: i32) -> (i32, i32) {
    %c0_i32 = arith.constant 0 : i32
    %c0_i32_0 = arith.constant 0 : i32
    return %c0_i32, %arg0 : i32, i32
  }
  func.func @transform_1(%arg0: i32) -> (i32, i32) {
    %c0_i32 = arith.constant 0 : i32
    %c0_i32_0 = arith.constant 0 : i32
    %c0_i32_1 = arith.constant 0 : i32
    return %c0_i32, %c0_i32_0 : i32, i32
  }
  func.func @transform_2(%arg0: i32) -> (i32, i32) {
    %c0_i32 = arith.constant 0 : i32
    %c0_i32_0 = arith.constant 0 : i32
    %c0_i32_1 = arith.constant 0 : i32
    return %c0_i32, %c0_i32_0 : i32, i32
  }
  func.func @transform_3(%arg0: i32) -> (i32, i32) {
    %c0_i32 = arith.constant 0 : i32
    %c0_i32_0 = arith.constant 0 : i32
    %c0_i32_1 = arith.constant 0 : i32
    return %c0_i32, %c0_i32_0 : i32, i32
  }
  func.func @transform_4(%arg0: i32) -> (i32, i32) {
    %c0_i32 = arith.constant 0 : i32
    %c0_i32_0 = arith.constant 0 : i32
    %c0_i32_1 = arith.constant 0 : i32
    return %c0_i32, %c0_i32_0 : i32, i32
  }
  func.func @transform_5(%arg0: i32) -> (i32, i32) {
    %c0_i32 = arith.constant 0 : i32
    %c0_i32_0 = arith.constant 0 : i32
    %c0_i32_1 = arith.constant 0 : i32
    return %c0_i32, %c0_i32_0 : i32, i32
  }
  func.func @transform_6(%arg0: i32) -> (i32, i32) {
    %c0_i32 = arith.constant 0 : i32
    %c0_i32_0 = arith.constant 0 : i32
    %c0_i32_1 = arith.constant 0 : i32
    return %c0_i32, %c0_i32_0 : i32, i32
  }
  func.func @transform_7(%arg0: i32) -> (i32, i32) {
    %c0_i32 = arith.constant 0 : i32
    %c0_i32_0 = arith.constant 0 : i32
    return %c0_i32, %arg0 : i32, i32
  }
}

</mosaic_0001>

<llo_original>
// kernel: tpu_custom_call.1
$region0: #{tpu_custom_call.1}
  #allocation0 [shape = 'u32[]', space=smem, size = 0x4, offset = 0x4, fixed_abs, tag = 'smem constant byte address 0x4 - core index']
  #allocation1 [shape = 'u32[144,128]{1,0:T(1,128)}', space=vmem, size = 0x12000, scoped, tag = 'internal scratch']
  #allocation2 [shape = 'f32[1,1]{1,0:T(1,128)S(1)}', space=vmem, size = 0x200, scoped, tag = 'scoped memory for tpu_custom_call.1']
  %s0 = inlined_call_operand.vmem [shape: f32[2,128], index: 0, kind: input, shape index: {}]
  %s1 = inlined_call_operand.vmem [shape: f32[8,2], index: 1, kind: input, shape index: {}]
  %s2 = inlined_call_operand.vmem [shape: f32[8,1], index: 2, kind: input, shape index: {}]
  %s3 = inlined_call_operand.vmem [shape: f32[8,8], index: 3, kind: input, shape index: {}]
  %s4 = inlined_call_operand.vmem [shape: f32[8,1], index: 4, kind: input, shape index: {}]
  %s5 = inlined_call_operand.vmem [shape: f32[1,8], index: 5, kind: input, shape index: {}]
  %s6 = inlined_call_operand.<no memory space> [shape: f32[1,1], index: 6, kind: input, shape index: {}]
  %s7 = inlined_call_operand.hbm [shape: f32[1,128], index: 7, kind: output, shape index: {}]
  %s8 = sld [smem:[#allocation0]]
  $region38: #{tpu_custom_call.1} parent=0
    _
  %s10 = ssub.s32 1, %s8
  %s11 = scalar_select 0, %s10, %s8
  %v12 = vstv %s6
  %13 = vst [vmem:[#allocation2] sm:$0x1] %v12
  $region1: #{tpu_custom_call.1} parent=0
    #allocation3 [shape = 'u8[512]{0}', space=vmem, size = 0x400, scoped, tag = 'output window, operand 0, single buffered']
    #allocation4 [shape = 's32[1]{0}', space=sflag, size = 0x4, scoped, tag = 'scoped memory for tpu_custom_call.1']
    %14 = vsyncpa [#allocation4], 0
    // Predicated region
    $region2: #{tpu_custom_call.1} parent=1 // pred_check
      _
    $region3: #{tpu_custom_call.1} parent=1 // pred_check_branch
      %16 = sbr.rel (0) target = $region5
    $region4: #{tpu_custom_call.1} parent=1 // pred_region
      _
    $region5: #{tpu_custom_call.1} parent=1 // pred_fallthru
      _
    // Predicated region
    $region6: #{tpu_custom_call.1} parent=1 // pred_check
      _
    $region7: #{tpu_custom_call.1} parent=1 // pred_check_branch
      %18 = sbr.rel (0) target = $region9
    $region8: #{tpu_custom_call.1} parent=1 // pred_region
      _
    $region9: #{tpu_custom_call.1} parent=1 // pred_fallthru
      _
    // Predicated region
    $region10: #{tpu_custom_call.1} parent=1 // pred_check
      _
    $region11: #{tpu_custom_call.1} parent=1 // pred_check_branch
      %20 = sbr.rel (0) target = $region13
    $region12: #{tpu_custom_call.1} parent=1 // pred_region
      _
    $region13: #{tpu_custom_call.1} parent=1 // pred_fallthru
      _
    // Predicated region
    $region14: #{tpu_custom_call.1} parent=1 // pred_check
      _
    $region15: #{tpu_custom_call.1} parent=1 // pred_check_branch
      %22 = sbr.rel (0) target = $region17
    $region16: #{tpu_custom_call.1} parent=1 // pred_region
      _
    $region17: #{tpu_custom_call.1} parent=1 // pred_fallthru
      _
    // Predicated region
    $region18: #{tpu_custom_call.1} parent=1 // pred_check
      _
    $region19: #{tpu_custom_call.1} parent=1 // pred_check_branch
      %24 = sbr.rel (0) target = $region21
    $region20: #{tpu_custom_call.1} parent=1 // pred_region
      _
    $region21: #{tpu_custom_call.1} parent=1 // pred_fallthru
      _
    // Predicated region
    $region22: #{tpu_custom_call.1} parent=1 // pred_check
      _
    $region23: #{tpu_custom_call.1} parent=1 // pred_check_branch
      %26 = sbr.rel (0) target = $region25
    $region24: #{tpu_custom_call.1} parent=1 // pred_region
      _
    $region25: #{tpu_custom_call.1} parent=1 // pred_fallthru
      _
    // Predicated region
    $region26: #{tpu_custom_call.1} parent=1 // pred_check
      _
    $region27: #{tpu_custom_call.1} parent=1 // pred_check_branch
      %28 = sbr.rel (0) target = $region29
    $region28: #{tpu_custom_call.1} parent=1 // pred_region
      _
    $region29: #{tpu_custom_call.1} parent=1 // pred_fallthru
      _
    %v29 = vld [vmem:[%s0] sm:$0x3]
    %v30 = vld [vmem:[%s1] sm:$0xff]
    %v31 = vld [vmem:[%s3] sm:$0xff]
    %v32 = vld [vmem:[%s5] sm:$0x1]
    %v33 = vld [vmem:[%s2] sm:$0xff]
    %35 = vset.pattern.permute.xlu0 0
    %36 = vperm.xlu0 %35, %v30
    %v37 = vpop.permute.xlu0 %36
    %v39 = vlaneseq
    %v40 = vshrl.u32 %v39, 7
    %v41 = vsub.s32 0, %v40
    %v42 = vrot.slane %v29, %v41
    %v43 = vmul.f32 %v37, %v42
    %45 = vset.pattern.permute.xlu0 0
    %46 = vperm.xlu0 %45, %v33
    %v47 = vpop.permute.xlu0 %46
    %v49 = vadd.f32 %v47, %v43
    %50 = vset.pattern.permute.xlu0 1
    %51 = vperm.xlu0 %50, %v30
    %v52 = vpop.permute.xlu0 %51
    %v54 = vlaneseq
    %v55 = vshrl.u32 %v54, 7
    %v56 = vsub.s32 1, %v55
    %v57 = vrot.slane %v29, %v56
    %v58 = vmul.f32 %v52, %v57
    %v59 = vadd.f32 %v49, %v58
    %v60 = vmax.f32 %v59, 0.0
    %v61 = vld [vmem:[%s4] sm:$0xff]
    %63 = vset.pattern.permute.xlu0 0
    %64 = vperm.xlu0 %63, %v31
    %v65 = vpop.permute.xlu0 %64
    %v67 = vlaneseq
    %v68 = vshrl.u32 %v67, 7
    %v69 = vsub.s32 0, %v68
    %v70 = vrot.slane %v60, %v69
    %v71 = vmul.f32 %v65, %v70
    %73 = vset.pattern.permute.xlu0 0
    %74 = vperm.xlu0 %73, %v61
    %v75 = vpop.permute.xlu0 %74
    %v77 = vadd.f32 %v75, %v71
    %78 = vset.pattern.permute.xlu0 1
    %79 = vperm.xlu0 %78, %v31
    %v80 = vpop.permute.xlu0 %79
    %v82 = vlaneseq
    %v83 = vshrl.u32 %v82, 7
    %v84 = vsub.s32 1, %v83
    %v85 = vrot.slane %v60, %v84
    %v86 = vmul.f32 %v80, %v85
    %v87 = vadd.f32 %v77, %v86
    %88 = vset.pattern.permute.xlu0 2
    %89 = vperm.xlu0 %88, %v31
    %v90 = vpop.permute.xlu0 %89
    %v92 = vlaneseq
    %v93 = vshrl.u32 %v92, 7
    %v94 = vsub.s32 2, %v93
    %v95 = vrot.slane %v60, %v94
    %v96 = vmul.f32 %v90, %v95
    %v97 = vadd.f32 %v87, %v96
    %98 = vset.pattern.permute.xlu0 3
    %99 = vperm.xlu0 %98, %v31
    %v100 = vpop.permute.xlu0 %99
    %v102 = vlaneseq
    %v103 = vshrl.u32 %v102, 7
    %v104 = vsub.s32 3, %v103
    %v105 = vrot.slane %v60, %v104
    %v106 = vmul.f32 %v100, %v105
    %v107 = vadd.f32 %v97, %v106
    %108 = vset.pattern.permute.xlu0 4
    %109 = vperm.xlu0 %108, %v31
    %v110 = vpop.permute.xlu0 %109
    %v112 = vlaneseq
    %v113 = vshrl.u32 %v112, 7
    %v114 = vsub.s32 4, %v113
    %v115 = vrot.slane %v60, %v114
    %v116 = vmul.f32 %v110, %v115
    %v117 = vadd.f32 %v107, %v116
    %118 = vset.pattern.permute.xlu0 5
    %119 = vperm.xlu0 %118, %v31
    %v120 = vpop.permute.xlu0 %119
    %v122 = vlaneseq
    %v123 = vshrl.u32 %v122, 7
    %v124 = vsub.s32 5, %v123
    %v125 = vrot.slane %v60, %v124
    %v126 = vmul.f32 %v120, %v125
    %v127 = vadd.f32 %v117, %v126
    %128 = vset.pattern.permute.xlu0 6
    %129 = vperm.xlu0 %128, %v31
    %v130 = vpop.permute.xlu0 %129
    %v132 = vlaneseq
    %v133 = vshrl.u32 %v132, 7
    %v134 = vsub.s32 6, %v133
    %v135 = vrot.slane %v60, %v134
    %v136 = vmul.f32 %v130, %v135
    %v137 = vadd.f32 %v127, %v136
    %138 = vset.pattern.permute.xlu0 7
    %139 = vperm.xlu0 %138, %v31
    %v140 = vpop.permute.xlu0 %139
    %v142 = vlaneseq
    %v143 = vshrl.u32 %v142, 7
    %v144 = vsub.s32 7, %v143
    %v145 = vrot.slane %v60, %v144
    %v146 = vmul.f32 %v140, %v145
    %v147 = vadd.f32 %v137, %v146
    %v148 = vmax.f32 %v147, 0.0
    %v149 = vld [vmem:[#allocation2] sm:$0x1]
    %151 = vset.pattern.permute.xlu0 0
    %152 = vperm.xlu0 %151, %v32
    %v153 = vpop.permute.xlu0 %152
    %v155 = vlaneseq
    %v156 = vshrl.u32 %v155, 7
    %v157 = vsub.s32 0, %v156
    %v158 = vrot.slane %v153, %v157
    %v159 = vmul.f32 %v158, %v148
    %161 = vset.pattern.permute.xlu0 0
    %162 = vperm.xlu0 %161, %v149
    %v163 = vpop.permute.xlu0 %162
    %v165 = vlaneseq
    %v166 = vshrl.u32 %v165, 7
    %v167 = vsub.s32 0, %v166
    %v168 = vrot.slane %v163, %v167
    %v169 = vadd.f32 %v168, %v159
    %170 = vset.pattern.permute.xlu0 1
    %171 = vperm.xlu0 %170, %v32
    %v172 = vpop.permute.xlu0 %171
    %v174 = vlaneseq
    %v175 = vshrl.u32 %v174, 7
    %v176 = vsub.s32 0, %v175
    %v177 = vrot.slane %v172, %v176
    %v178 = vmul.f32 %v177, %v148
    %v180 = vrot.slane %v178, 1
    %v182 = vadd.f32 %v169, %v180
    %183 = vset.pattern.permute.xlu0 2
    %184 = vperm.xlu0 %183, %v32
    %v185 = vpop.permute.xlu0 %184
    %v187 = vlaneseq
    %v188 = vshrl.u32 %v187, 7
    %v189 = vsub.s32 0, %v188
    %v190 = vrot.slane %v185, %v189
    %v191 = vmul.f32 %v190, %v148
    %v193 = vrot.slane %v191, 2
    %v195 = vadd.f32 %v182, %v193
    %196 = vset.pattern.permute.xlu0 3
    %197 = vperm.xlu0 %196, %v32
    %v198 = vpop.permute.xlu0 %197
    %v200 = vlaneseq
    %v201 = vshrl.u32 %v200, 7
    %v202 = vsub.s32 0, %v201
    %v203 = vrot.slane %v198, %v202
    %v204 = vmul.f32 %v203, %v148
    %v206 = vrot.slane %v204, 3
    %v208 = vadd.f32 %v195, %v206
    %209 = vset.pattern.permute.xlu0 4
    %210 = vperm.xlu0 %209, %v32
    %v211 = vpop.permute.xlu0 %210
    %v213 = vlaneseq
    %v214 = vshrl.u32 %v213, 7
    %v215 = vsub.s32 0, %v214
    %v216 = vrot.slane %v211, %v215
    %v217 = vmul.f32 %v216, %v148
    %v219 = vrot.slane %v217, 4
    %v221 = vadd.f32 %v208, %v219
    %222 = vset.pattern.permute.xlu0 5
    %223 = vperm.xlu0 %222, %v32
    %v224 = vpop.permute.xlu0 %223
    %v226 = vlaneseq
    %v227 = vshrl.u32 %v226, 7
    %v228 = vsub.s32 0, %v227
    %v229 = vrot.slane %v224, %v228
    %v230 = vmul.f32 %v229, %v148
    %v232 = vrot.slane %v230, 5
    %v234 = vadd.f32 %v221, %v232
    %235 = vset.pattern.permute.xlu0 6
    %236 = vperm.xlu0 %235, %v32
    %v237 = vpop.permute.xlu0 %236
    %v239 = vlaneseq
    %v240 = vshrl.u32 %v239, 7
    %v241 = vsub.s32 0, %v240
    %v242 = vrot.slane %v237, %v241
    %v243 = vmul.f32 %v242, %v148
    %v245 = vrot.slane %v243, 6
    %v247 = vadd.f32 %v234, %v245
    %248 = vset.pattern.permute.xlu0 7
    %249 = vperm.xlu0 %248, %v32
    %v250 = vpop.permute.xlu0 %249
    %v252 = vlaneseq
    %v253 = vshrl.u32 %v252, 7
    %v254 = vsub.s32 0, %v253
    %v255 = vrot.slane %v250, %v254
    %v256 = vmul.f32 %v255, %v148
    %v258 = vrot.slane %v256, 7
    %v260 = vadd.f32 %v247, %v258
    %v261 = vtanh.pop %v260
    %262 = vst [vmem:[#allocation3] sm:$0x1] %v261
    // Predicated region
    $region30: #{tpu_custom_call.1} parent=1 // pred_check
      _
    $region31: #{tpu_custom_call.1} parent=1 // pred_check_branch
      %264 = sbr.rel (0) target = $region33
    $region32: #{tpu_custom_call.1} parent=1 // pred_region
      %s266 = ssub.s32 16, 16
      %267 = vsyncadd [#allocation4], %s266
      %s269 = sshll.u32 [#allocation3], 4
      %s270 = int_to_ptr.vmem [resolvable:$true] %s269
      %272 = dma.vmem_to_hbm [thread:$0]  %s270, 16, %s7, [#allocation4]
    $region33: #{tpu_custom_call.1} parent=1 // pred_fallthru
      _
    // Predicated region
    $region34: #{tpu_custom_call.1} parent=1 // pred_check
      _
    $region35: #{tpu_custom_call.1} parent=1 // pred_check_branch
      %274 = sbr.rel (0) target = $region37
    $region36: #{tpu_custom_call.1} parent=1 // pred_region
      %275 = dma.done [#allocation4], 16
    $region37: #{tpu_custom_call.1} parent=1 // pred_fallthru
      _
    %276 = vsyncpa [#allocation4], 1

</llo_original>
